<compile_context>
chip_gen: v7x
topology: tpu7x:2x2x1
jax: 0.10.0
libtpu: 0.0.40
codegen_flags: <defaults>
</compile_context>

<pallas_src>
import math
import functools

import jax
import jax.numpy as jnp
from jax.experimental import pallas as pl
from jax.experimental.pallas import tpu as pltpu


# ------------------------- fused matmul kernel (1x1 conv / Linear) -------------------------

def _matmul_kernel(*refs, act, has_res):
    if has_res:
        a_ref, w_ref, b_ref, r_ref, o_ref = refs
    else:
        a_ref, w_ref, b_ref, o_ref = refs
    out = jnp.dot(a_ref[...].astype(jnp.bfloat16), w_ref[...],
                  preferred_element_type=jnp.float32) + b_ref[...]
    if act == "silu":
        out = out * jax.nn.sigmoid(out)
    if has_res:
        out = out + r_ref[...]
    o_ref[...] = out.astype(o_ref.dtype)


@functools.partial(jax.jit, static_argnames=("act",))
def fused_matmul(a, w, b, residual=None, act=None):
    """out = a @ w + b (+ optional fused SiLU and/or residual).

    a: (M, K) f32, w: (K, N) bf16 (pre-packed), b: (1, N) f32.
    """
    M, K = a.shape
    K2, N = w.shape
    assert K == K2
    has_res = residual is not None

    TM = M if M <= 1024 else 512
    Mp = ((M + TM - 1) // TM) * TM
    a_p = a if Mp == M else jnp.pad(a, ((0, Mp - M), (0, 0)))
    r_p = residual
    if has_res and Mp != M:
        r_p = jnp.pad(residual, ((0, Mp - M), (0, 0)))

    ins = [a_p, w, b] + ([r_p] if has_res else [])
    in_specs = [
        pl.BlockSpec((TM, K), lambda i: (i, 0)),
        pl.BlockSpec((K, N), lambda i: (0, 0)),
        pl.BlockSpec((1, N), lambda i: (0, 0)),
    ]
    if has_res:
        in_specs.append(pl.BlockSpec((TM, N), lambda i: (i, 0)))

    out = pl.pallas_call(
        functools.partial(_matmul_kernel, act=act, has_res=has_res),
        out_shape=jax.ShapeDtypeStruct((Mp, N), jnp.float32),
        grid=(Mp // TM,),
        in_specs=in_specs,
        out_specs=pl.BlockSpec((TM, N), lambda i: (i, 0)),
        compiler_params=pltpu.CompilerParams(dimension_semantics=("parallel",)),
    )(*ins)
    return out if Mp == M else out[:M]


def conv1x1(x, w, b):
    """1x1 Conv (NHWC or (B, L, C)) = fused matmul over the flattened leading dims."""
    shape = x.shape
    cout = w.shape[-1]
    y = fused_matmul(x.reshape(-1, shape[-1]), w, b)
    return y.reshape(shape[:-1] + (cout,))


# --------------------------------- Conv2d 3x3 kernel ---------------------------------

def _conv3x3_kernel(x_ref, w_ref, b_ref, o_ref, *, H, Wp2):
    # x_ref: (1, (H+3)*(W+2), Cin) flat view of the spatially padded plane.
    # w_ref: (9, Cin, Cout) bf16.  o_ref: (1, H*(W+2), Cout) f32 (2 junk cols/row).
    m = H * Wp2
    cout = o_ref.shape[-1]
    acc = jnp.zeros((m, cout), jnp.float32)
    for dh in range(3):
        for dw in range(3):
            start = dh * Wp2 + dw
            a = x_ref[0, start:start + m, :].astype(jnp.bfloat16)
            acc = acc + jnp.dot(a, w_ref[dh * 3 + dw],
                                preferred_element_type=jnp.float32)
    o_ref[0] = acc + b_ref[...]


@jax.jit
def conv2d_3x3(x, w, b, residual=None):
    """Conv2d(k=3, padding=1) on NHWC; optional fused residual add.

    x: (N, H, W, Cin) f32, w: (9, Cin, Cout) bf16, b: (1, Cout) f32.
    """
    N, H, W, Cin = x.shape
    Cout = w.shape[-1]
    Wp2 = W + 2
    # +1 top / +2 bottom rows so every flat 3x3 tap window stays in bounds.
    xp = jnp.pad(x, ((0, 0), (1, 2), (1, 1), (0, 0)))
    xf = xp.reshape(N, (H + 3) * Wp2, Cin)          # free (contiguous) reshape
    M = H * Wp2

    out = pl.pallas_call(
        functools.partial(_conv3x3_kernel, H=H, Wp2=Wp2),
        out_shape=jax.ShapeDtypeStruct((N, M, Cout), jnp.float32),
        grid=(N,),
        in_specs=[
            pl.BlockSpec((1, (H + 3) * Wp2, Cin), lambda n: (n, 0, 0)),
            pl.BlockSpec((9, Cin, Cout), lambda n: (0, 0, 0)),
            pl.BlockSpec((1, Cout), lambda n: (0, 0)),
        ],
        out_specs=pl.BlockSpec((1, M, Cout), lambda n: (n, 0, 0)),
        compiler_params=pltpu.CompilerParams(dimension_semantics=("parallel",)),
    )(xf, w, b)

    # Strip the flat-window junk columns; XLA fuses this slice with the residual add.
    y = out.reshape(N, H, Wp2, Cout)[:, :, :W, :]
    if residual is not None:
        y = y + residual
    return y


# --------------------------- GroupNorm (+AdaGN affine +SiLU) kernel ---------------------------

def _groupnorm_kernel(*refs, cpg, eps, silu, ada):
    if ada:
        x_ref, sc_ref, sh_ref, o_ref = refs
    else:
        x_ref, o_ref = refs
    x = x_ref[0]                                      # (S, C) f32
    s_rows, c = x.shape
    # (C, C) same-group indicator — group stats via matmul, no in-kernel reshapes.
    ci = jax.lax.broadcasted_iota(jnp.int32, (c, c), 0) // cpg
    cj = jax.lax.broadcasted_iota(jnp.int32, (c, c), 1) // cpg
    gmask = (ci == cj).astype(jnp.float32)
    inv_n = 1.0 / float(s_rows * cpg)
    mean = jnp.dot(jnp.sum(x, axis=0, keepdims=True), gmask,
                   preferred_element_type=jnp.float32) * inv_n        # (1, C)
    d = x - mean
    var = jnp.dot(jnp.sum(d * d, axis=0, keepdims=True), gmask,
                  preferred_element_type=jnp.float32) * inv_n         # (1, C), biased
    y = d * jax.lax.rsqrt(var + eps)
    if ada:
        y = y * (1.0 + sc_ref[0]) + sh_ref[0]
    if silu:
        y = y * jax.nn.sigmoid(y)
    o_ref[0] = y


@functools.partial(jax.jit, static_argnames=("silu",))
def group_norm(x, scale=None, shift=None, silu=False):
    """nn.GroupNorm(C//16, C, affine=False) on channels-last input, with optional
    fused AdaGN affine (scale/shift per (batch, channel)) and fused SiLU."""
    shape = x.shape
    N, C = shape[0], shape[-1]
    S = math.prod(shape[1:-1]) if len(shape) > 2 else 1
    x3 = x.reshape(N, S, C)
    ada = scale is not None

    ins = [x3]
    in_specs = [pl.BlockSpec((1, S, C), lambda n: (n, 0, 0))]
    if ada:
        ins += [scale.reshape(N, 1, C), shift.reshape(N, 1, C)]
        in_specs += [pl.BlockSpec((1, 1, C), lambda n: (n, 0, 0))] * 2

    out = pl.pallas_call(
        functools.partial(_groupnorm_kernel, cpg=16, eps=1e-5, silu=silu, ada=ada),
        out_shape=jax.ShapeDtypeStruct((N, S, C), jnp.float32),
        grid=(N,),
        in_specs=in_specs,
        out_specs=pl.BlockSpec((1, S, C), lambda n: (n, 0, 0)),
        compiler_params=pltpu.CompilerParams(dimension_semantics=("parallel",)),
    )(*ins)
    return out.reshape(shape)


# ----------------------------------- self-attention kernel -----------------------------------

def _attention_kernel(q_ref, k_ref, v_ref, o_ref, *, scale2):
    # blocks: (1, ch, L); scale^2 folded into q before the QK^T matmul.
    q = (q_ref[0] * scale2).astype(jnp.bfloat16)
    k = k_ref[0].astype(jnp.bfloat16)
    v = v_ref[0].astype(jnp.bfloat16)
    s = jax.lax.dot_general(q, k, (((0,), (0,)), ((), ())),
                            preferred_element_type=jnp.float32)        # (L, L)
    s = s - jnp.max(s, axis=-1, keepdims=True)
    p = jnp.exp(s)
    inv = pl.reciprocal(jnp.sum(p, axis=-1, keepdims=True), approx=True)
    p = (p * inv).astype(jnp.bfloat16)
    # out[c, t] = sum_s v[c, s] * p[t, s]
    o_ref[0] = jax.lax.dot_general(v, p, (((1,), (1,)), ((), ())),
                                   preferred_element_type=jnp.float32)


@jax.jit
def self_attention(q, k, v):
    # q, k, v: (B*num_heads, ch, L) f32.
    BH, ch, L = q.shape
    scale2 = 1.0 / math.sqrt(ch)      # (1/sqrt(sqrt(ch)))^2
    # TODO(synk): at full scale (L >= 1024) tile the key axis (online softmax) so the
    # (L, L) scores never exceed v7x's 64 MiB VMEM.
    return pl.pallas_call(
        functools.partial(_attention_kernel, scale2=scale2),
        out_shape=jax.ShapeDtypeStruct((BH, ch, L), jnp.float32),
        grid=(BH,),
        in_specs=[pl.BlockSpec((1, ch, L), lambda b: (b, 0, 0))] * 3,
        out_specs=pl.BlockSpec((1, ch, L), lambda b: (b, 0, 0)),
        compiler_params=pltpu.CompilerParams(dimension_semantics=("parallel",)),
    )(q, k, v)


# ------------------------------------- parameter init -------------------------------------

class ParamGen:
    def __init__(self, key):
        self.key = key

    def take(self, shape, scale=0.05):
        self.key, sub = jax.random.split(self.key)
        return scale * jax.random.normal(sub, shape, jnp.float32)


def init_conv3x3(pg, cin, cout, zero=False):
    if zero:  # zero_out()
        return {"w": jnp.zeros((9, cin, cout), jnp.bfloat16),
                "b": jnp.zeros((1, cout), jnp.float32)}
    return {"w": pg.take((9, cin, cout)).astype(jnp.bfloat16),
            "b": pg.take((1, cout))}


def init_dense(pg, cin, cout, zero=False):  # 1x1 conv (1d/2d) and Linear
    if zero:  # zero_out()
        return {"w": jnp.zeros((cin, cout), jnp.bfloat16),
                "b": jnp.zeros((1, cout), jnp.float32)}
    return {"w": pg.take((cin, cout)).astype(jnp.bfloat16),
            "b": pg.take((1, cout))}


def init_resblock(pg, cin, cout, emb_dim, up=False, down=False):
    # NOTE: the PyTorch ResBlock also defines `self.emb` (never used in forward()),
    # so it is intentionally not materialized here.
    return {
        "cin": cin, "cout": cout, "up": up, "down": down,
        "conv1": init_conv3x3(pg, cin, cout),
        "conv2": init_conv3x3(pg, cout, cout, zero=True),      # zero_out
        "conv3": init_dense(pg, cin, cout) if cin != cout else None,
        "embed_l1": init_dense(pg, emb_dim, emb_dim),
        "embed_l2": init_dense(pg, emb_dim, 2 * cout),
    }


def init_attention(pg, channel):
    return {"channel": channel, "num_head": channel // 32,
            "qkv": init_dense(pg, channel, channel * 3),
            "out": init_dense(pg, channel, channel, zero=True)}   # zero_out


def init_unet(pg, image_channel=3, depth=2, emb_dim=1024, num_classes=10,
              channels=(160, 320, 640, 1280)):
    channels = list(channels)
    attention_channel = channels[1:]
    params = {}

    encoder = [[("conv", init_conv3x3(pg, image_channel, channels[0]))]]
    skip_channel = [channels[0]]
    for i in range(len(channels)):
        for _ in range(depth):
            layer = [("res", init_resblock(pg, channels[i], channels[i], emb_dim))]
            if channels[i] in attention_channel:
                layer.append(("attn", init_attention(pg, channels[i])))
            encoder.append(layer)
            skip_channel.append(channels[i])
        if i != len(channels) - 1:
            encoder.append([("res", init_resblock(pg, channels[i], channels[i + 1],
                                                  emb_dim, down=True))])
            skip_channel.append(channels[i + 1])
    params["encoder"] = encoder

    # (original uses the default emb_dim for the bottleneck ResBlocks; kept consistent
    # with the scaled-down config here)
    params["bottleneck"] = [
        ("res", init_resblock(pg, channels[-1], channels[-1], emb_dim)),
        ("attn", init_attention(pg, channels[-1])),
        ("res", init_resblock(pg, channels[-1], channels[-1], emb_dim)),
    ]

    decoder = []
    for i in range(len(channels) - 1, -1, -1):
        for block in range(depth + 1):
            layer = [("res", init_resblock(pg, channels[i] + skip_channel.pop(),
                                           channels[i], emb_dim))]
            if channels[i] in attention_channel:
                layer.append(("attn", init_attention(pg, channels[i])))
            if i != 0 and block == depth:
                layer.append(("res", init_resblock(pg, channels[i], channels[i - 1],
                                                   emb_dim, up=True)))
            decoder.append(layer)
    params["decoder"] = decoder

    params["time_l1"] = init_dense(pg, emb_dim, emb_dim)
    params["time_l2"] = init_dense(pg, emb_dim, emb_dim)
    params["class_emb"] = pg.take((num_classes, emb_dim))
    params["out_conv"] = init_conv3x3(pg, channels[0], image_channel, zero=True)
    return params


# ---------------------------------------- forward ----------------------------------------

def change_size(x, up, down):
    # TODO(synk): fuse upsample / avg-pool / the decoder skip-concat into the conv
    # kernel's index mapping instead of materializing them in plain JAX.
    if up:     # nn.Upsample(scale_factor=2, mode='nearest')  (NHWC)
        return jnp.repeat(jnp.repeat(x, 2, axis=1), 2, axis=2)
    if down:   # nn.AvgPool2d(2, 2)  (NHWC)
        N, H, W, C = x.shape
        return x.reshape(N, H // 2, 2, W // 2, 2, C).mean(axis=(2, 4))
    return x


def resblock_forward(p, x, emb):
    # embed: Linear -> SiLU -> Linear  (SiLU fused into the first matmul)
    e = fused_matmul(emb, p["embed_l1"]["w"], p["embed_l1"]["b"], act="silu")
    e = fused_matmul(e, p["embed_l2"]["w"], p["embed_l2"]["b"])
    scale, shift = jnp.split(e, 2, axis=1)                 # (B, cout) each

    # input: GroupNorm -> SiLU (fused) -> change_size -> conv1
    h = group_norm(x, silu=True)
    h = change_size(h, p["up"], p["down"])
    h = conv2d_3x3(h, p["conv1"]["w"], p["conv1"]["b"])
    # AdaGN affine and the following SiLU fused into the GroupNorm kernel
    h = group_norm(h, scale=scale, shift=shift, silu=True)

    # skip: change_size -> conv3 (or identity)
    xs = change_size(x, p["up"], p["down"])
    if p["conv3"] is not None:
        xs = conv1x1(xs, p["conv3"]["w"], p["conv3"]["b"])

    # output: zero_out(conv2); residual add fused into the conv wrapper epilogue
    return conv2d_3x3(h, p["conv2"]["w"], p["conv2"]["b"], residual=xs)


def attention_forward(p, x):
    N, H, W, C = x.shape
    L = H * W
    nh = p["num_head"]
    ch = C // nh

    skip = x.reshape(N * L, C)
    tn = group_norm(x.reshape(N, L, C))                                # (N, L, C)
    qkv = fused_matmul(tn.reshape(N * L, C), p["qkv"]["w"], p["qkv"]["b"])
    qkv = qkv.reshape(N, L, 3, nh, ch)
    qkv = jnp.transpose(qkv, (2, 0, 3, 4, 1))                          # (3, N, nh, ch, L)
    q = qkv[0].reshape(N * nh, ch, L)
    k = qkv[1].reshape(N * nh, ch, L)
    v = qkv[2].reshape(N * nh, ch, L)

    a = self_attention(q, k, v)                                        # (N*nh, ch, L)
    a = jnp.transpose(a.reshape(N, nh, ch, L), (0, 3, 1, 2)).reshape(N * L, C)

    # zero_out projection with the skip residual fused into the matmul epilogue
    out = fused_matmul(a, p["out"]["w"], p["out"]["b"], residual=skip)
    return out.reshape(N, H, W, C)


def _apply_layer(layer, x, emb):
    for kind, p in layer:
        if kind == "res":
            x = resblock_forward(p, x, emb)
        elif kind == "attn":
            x = attention_forward(p, x)
        else:  # "conv"
            x = conv2d_3x3(x, p["w"], p["b"])
    return x


def unet_forward(params, x_nchw, time_embedding, label):
    x = jnp.transpose(x_nchw, (0, 2, 3, 1))                           # NCHW -> NHWC once
    emb = fused_matmul(time_embedding, params["time_l1"]["w"],
                       params["time_l1"]["b"], act="silu")
    emb = fused_matmul(emb, params["time_l2"]["w"], params["time_l2"]["b"])
    if label is not None:
        emb = emb + params["class_emb"][label]

    skips = []
    for layer in params["encoder"]:
        x = _apply_layer(layer, x, emb)
        skips.append(x)
    x = _apply_layer(params["bottleneck"], x, emb)
    for layer in params["decoder"]:
        x = jnp.concatenate((x, skips.pop()), axis=-1)
        x = _apply_layer(layer, x, emb)

    # out: GroupNorm -> SiLU (fused) -> zero_out(Conv2d 3x3)
    x = group_norm(x, silu=True)
    x = conv2d_3x3(x, params["out_conv"]["w"], params["out_conv"]["b"])
    return jnp.transpose(x, (0, 3, 1, 2))                             # back to NCHW


# ------------------------------------------ main ------------------------------------------

if __name__ == "__main__":
    # Scaled-down but structurally identical config (original: channels
    # (160,320,640,1280), emb_dim=1024) so the demo runs quickly at small shapes.
    channels = (32, 64, 128, 256)
    emb_dim = 256

    pg = ParamGen(jax.random.PRNGKey(0))
    params = init_unet(pg, image_channel=3, depth=2, emb_dim=emb_dim,
                       num_classes=10, channels=channels)

    kx, kt = jax.random.split(jax.random.PRNGKey(0), 2)
    x = jax.random.normal(kx, (2, 3, 16, 16), jnp.float32)            # NCHW input
    temb = jax.random.normal(kt, (2, emb_dim), jnp.float32)
    label = jnp.array([1, 7], dtype=jnp.int32)

    out = unet_forward(params, x, temb, label)
    out = jax.block_until_ready(out)
    assert out.shape == (2, 3, 16, 16)
    assert bool(jnp.all(jnp.isfinite(out)))
    # NOTE: the final conv is zero_out'ed (as in the PyTorch module), so the output
    # is exactly zero by construction — this is the correct semantics.
    print("KERNEL_OK")
</pallas_src>

<mosaic_0001>
module attributes {stable_mosaic.version = 11 : i64} {
  func.func @_matmul_kernel(%arg0: i32, %arg1: memref<2x256xf32, #tpu.memory_space<vmem>>, %arg2: memref<256x256xbf16, #tpu.memory_space<vmem>>, %arg3: memref<1x256xf32, #tpu.memory_space<vmem>>, %arg4: memref<2x256xf32, #tpu.memory_space<vmem>>) attributes {dimension_semantics = [#tpu.dimension_semantics<parallel>], iteration_bounds = array<i64: 1>, scalar_prefetch = 0 : i64, scratch_operands = 0 : i64, tpu.core_type = #tpu.core_type<tc>, window_params = [{transform_indices = @transform_0, window_bounds = array<i64: 2, 256>}, {pipeline_mode = #tpu.pipeline_mode<synchronous>, transform_indices = @transform_1, window_bounds = array<i64: 256, 256>}, {pipeline_mode = #tpu.pipeline_mode<synchronous>, transform_indices = @transform_2, window_bounds = array<i64: 1, 256>}, {transform_indices = @transform_3, window_bounds = array<i64: 2, 256>}]} {
    %c0 = arith.constant 0 : index
    %c0_0 = arith.constant 0 : index
    %0 = vector.load %arg1[%c0, %c0_0] : memref<2x256xf32, #tpu.memory_space<vmem>>, vector<2x256xf32>
    %1 = arith.truncf %0 : vector<2x256xf32> to vector<2x256xbf16>
    %c0_1 = arith.constant 0 : index
    %c0_2 = arith.constant 0 : index
    %2 = vector.load %arg2[%c0_1, %c0_2] : memref<256x256xbf16, #tpu.memory_space<vmem>>, vector<256x256xbf16>
    %cst = arith.constant dense<0.000000e+00> : vector<2x256xf32>
    %3 = tpu.matmul %1, %2, %cst {dimension_numbers = #tpu.dot_dimension_numbers<[1], [0], [0], [1], [0, 0, 1, 1], [], []>} : vector<2x256xbf16>, vector<256x256xbf16>, vector<2x256xf32> -> vector<2x256xf32>
    %c0_3 = arith.constant 0 : index
    %c0_4 = arith.constant 0 : index
    %4 = vector.load %arg3[%c0_3, %c0_4] : memref<1x256xf32, #tpu.memory_space<vmem>>, vector<1x256xf32>
    %5 = vector.broadcast %4 : vector<1x256xf32> to vector<2x256xf32>
    %6 = arith.addf %3, %5 : vector<2x256xf32>
    %7 = arith.negf %6 : vector<2x256xf32>
    %8 = math.exp %7 : vector<2x256xf32>
    %cst_5 = arith.constant 1.000000e+00 : f32
    %9 = vector.broadcast %cst_5 : f32 to vector<2x256xf32>
    %10 = arith.addf %9, %8 : vector<2x256xf32>
    %11 = arith.divf %9, %10 : vector<2x256xf32>
    %12 = arith.mulf %6, %11 : vector<2x256xf32>
    %c0_6 = arith.constant 0 : index
    %c0_7 = arith.constant 0 : index
    %13 = vector.load %arg4[%c0_6, %c0_7] : memref<2x256xf32, #tpu.memory_space<vmem>>, vector<2x256xf32>
    tpu.vector_store %arg4[%c0_6, %c0_7], %12 {strides = array<i32>} : memref<2x256xf32, #tpu.memory_space<vmem>>, vector<2x256xf32>,
    return
  }
  func.func @transform_0(%arg0: i32) -> (i32, i32) {
    %c0_i32 = arith.constant 0 : i32
    %c0_i32_0 = arith.constant 0 : i32
    return %arg0, %c0_i32 : i32, i32
  }
  func.func @transform_1(%arg0: i32) -> (i32, i32) {
    %c0_i32 = arith.constant 0 : i32
    %c0_i32_0 = arith.constant 0 : i32
    %c0_i32_1 = arith.constant 0 : i32
    return %c0_i32, %c0_i32_0 : i32, i32
  }
  func.func @transform_2(%arg0: i32) -> (i32, i32) {
    %c0_i32 = arith.constant 0 : i32
    %c0_i32_0 = arith.constant 0 : i32
    %c0_i32_1 = arith.constant 0 : i32
    return %c0_i32, %c0_i32_0 : i32, i32
  }
  func.func @transform_3(%arg0: i32) -> (i32, i32) {
    %c0_i32 = arith.constant 0 : i32
    %c0_i32_0 = arith.constant 0 : i32
    return %arg0, %c0_i32 : i32, i32
  }
}

</mosaic_0001>

<llo_original>
// kernel: fused_matmul.1
$region0: #{fused_matmul.1}
  #allocation0 [shape = 'u32[]', space=smem, size = 0x4, offset = 0x4, fixed_abs, tag = 'smem constant byte address 0x4 - core index']
  #allocation1 [shape = 'u32[144,128]{1,0:T(1,128)}', space=vmem, size = 0x12000, scoped, tag = 'internal scratch']
  %s0 = inlined_call_operand.hbm [shape: f32[2,256], index: 0, kind: input, shape index: {}]
  %s1 = inlined_call_operand.hbm [shape: bf16[256,256], index: 1, kind: input, shape index: {}]
  %s2 = inlined_call_operand.vmem [shape: f32[1,256], index: 2, kind: input, shape index: {}]
  %s3 = inlined_call_operand.hbm [shape: f32[2,256], index: 3, kind: output, shape index: {}]
  %s4 = sld [smem:[#allocation0]]
  $region30: #{fused_matmul.1} parent=0
    _
  %s6 = ssub.s32 1, %s4
  %s7 = scalar_select 0, %s6, %s4
  $region1: #{fused_matmul.1} parent=0
    #allocation2 [shape = 'u8[2048]{0}', space=vmem, size = 0x800, scoped, tag = 'input window, operand 0, single buffered']
    #allocation3 [shape = 's32[1]{0}', space=sflag, size = 0x4, scoped, tag = 'scoped memory for fused_matmul.1']
    #allocation4 [shape = 's32[1]{0}', space=sflag, size = 0x4, scoped, tag = 'scoped memory for fused_matmul.1']
    #allocation5 [shape = 'u8[131072]{0}', space=vmem, size = 0x20000, scoped, tag = 'input window, operand 1, single buffered']
    #allocation6 [shape = 's32[1]{0}', space=sflag, size = 0x4, scoped, tag = 'scoped memory for fused_matmul.1']
    #allocation7 [shape = 'u8[2048]{0}', space=vmem, size = 0x800, scoped, tag = 'output window, operand 0, single buffered']
    %8 = vsyncpa [#allocation3], 0
    %9 = vsyncpa [#allocation6], 0
    %10 = vsyncpa [#allocation4], 0
    // Predicated region
    $region2: #{fused_matmul.1} parent=1 // pred_check
      _
    $region3: #{fused_matmul.1} parent=1 // pred_check_branch
      %12 = sbr.rel (0) target = $region5
    $region4: #{fused_matmul.1} parent=1 // pred_region
      %s14 = ssub.s32 64, 64
      %15 = vsyncadd [#allocation3], %s14
      %s17 = sshll.u32 [#allocation2], 4
      %s18 = int_to_ptr.vmem [resolvable:$true] %s17
      %20 = dma.hbm_to_vmem [thread:$0]  %s0, 64, %s18, [#allocation3]
    $region5: #{fused_matmul.1} parent=1 // pred_fallthru
      _
    // Predicated region
    $region6: #{fused_matmul.1} parent=1 // pred_check
      _
    $region7: #{fused_matmul.1} parent=1 // pred_check_branch
      %22 = sbr.rel (0) target = $region9
    $region8: #{fused_matmul.1} parent=1 // pred_region
      %s24 = ssub.s32 4096, 4096
      %25 = vsyncadd [#allocation6], %s24
      %s26 = sshll.u32 [#allocation5], 4
      %s27 = int_to_ptr.vmem [resolvable:$true] %s26
      %32 = dma.hbm_to_vmem [thread:$0]  %s1, 4096, %s27, [#allocation6], 128, 128, 8
    $region9: #{fused_matmul.1} parent=1 // pred_fallthru
      _
    // Predicated region
    $region10: #{fused_matmul.1} parent=1 // pred_check
      _
    $region11: #{fused_matmul.1} parent=1 // pred_check_branch
      %34 = sbr.rel (0) target = $region13
    $region12: #{fused_matmul.1} parent=1 // pred_region
      _
    $region13: #{fused_matmul.1} parent=1 // pred_fallthru
      _
    // Predicated region
    $region14: #{fused_matmul.1} parent=1 // pred_check
      _
    $region15: #{fused_matmul.1} parent=1 // pred_check_branch
      %36 = sbr.rel (0) target = $region17
    $region16: #{fused_matmul.1} parent=1 // pred_region
      %37 = dma.done [#allocation3], 64
    $region17: #{fused_matmul.1} parent=1 // pred_fallthru
      _
    // Predicated region
    $region18: #{fused_matmul.1} parent=1 // pred_check
      _
    $region19: #{fused_matmul.1} parent=1 // pred_check_branch
      %39 = sbr.rel (0) target = $region21
    $region20: #{fused_matmul.1} parent=1 // pred_region
      %40 = dma.done [#allocation6], 4096
    $region21: #{fused_matmul.1} parent=1 // pred_fallthru
      _
    %v41 = vld [vmem:[#allocation2] sm:$0xf]
    %v44 = vunpack.c.l.s4 1983009808
    %v45 = vunpack.c.0.s8 %v44
    %v46 = vlaneseq
    %v47 = vshrl.u32 %v46, 7
    %v48 = vsub.s32 %v45, %v47
    %v49 = vrot.slane %v41, %v48
    %v50 = vcombine.high %v49, %v49
    %v53 = vpack.c.bf16 %v49, %v49
    %v54 = vpack.c.bf16 %v50, %v50
    %v55 = vld [vmem:[#allocation5] sm:$0xff]
    %v56 = vld [vmem:[#allocation5 + $0x8] sm:$0xff]
    %v57 = vld [vmem:[#allocation5 + $0x10] sm:$0xff]
    %v58 = vld [vmem:[#allocation5 + $0x18] sm:$0xff]
    %v59 = vld [vmem:[#allocation5 + $0x20] sm:$0xff]
    %v60 = vld [vmem:[#allocation5 + $0x28] sm:$0xff]
    %v61 = vld [vmem:[#allocation5 + $0x30] sm:$0xff]
    %v62 = vld [vmem:[#allocation5 + $0x38] sm:$0xff]
    %v63 = vld [vmem:[#allocation5 + $0x40] sm:$0xff]
    %v64 = vld [vmem:[#allocation5 + $0x48] sm:$0xff]
    %v65 = vld [vmem:[#allocation5 + $0x50] sm:$0xff]
    %v66 = vld [vmem:[#allocation5 + $0x58] sm:$0xff]
    %v67 = vld [vmem:[#allocation5 + $0x60] sm:$0xff]
    %v68 = vld [vmem:[#allocation5 + $0x68] sm:$0xff]
    %v69 = vld [vmem:[#allocation5 + $0x70] sm:$0xff]
    %v70 = vld [vmem:[#allocation5 + $0x78] sm:$0xff]
    %v71 = vld [vmem:[#allocation5 + $0x80] sm:$0xff]
    %v72 = vld [vmem:[#allocation5 + $0x88] sm:$0xff]
    %v73 = vld [vmem:[#allocation5 + $0x90] sm:$0xff]
    %v74 = vld [vmem:[#allocation5 + $0x98] sm:$0xff]
    %v75 = vld [vmem:[#allocation5 + $0xa0] sm:$0xff]
    %v76 = vld [vmem:[#allocation5 + $0xa8] sm:$0xff]
    %v77 = vld [vmem:[#allocation5 + $0xb0] sm:$0xff]
    %v78 = vld [vmem:[#allocation5 + $0xb8] sm:$0xff]
    %v79 = vld [vmem:[#allocation5 + $0xc0] sm:$0xff]
    %v80 = vld [vmem:[#allocation5 + $0xc8] sm:$0xff]
    %v81 = vld [vmem:[#allocation5 + $0xd0] sm:$0xff]
    %v82 = vld [vmem:[#allocation5 + $0xd8] sm:$0xff]
    %v83 = vld [vmem:[#allocation5 + $0xe0] sm:$0xff]
    %v84 = vld [vmem:[#allocation5 + $0xe8] sm:$0xff]
    %v85 = vld [vmem:[#allocation5 + $0xf0] sm:$0xff]
    %v86 = vld [vmem:[#allocation5 + $0xf8] sm:$0xff]
    %v87 = vld [vmem:[%s2] sm:$0x3]
    %v89 = vlaneseq
    %v90 = vshrl.u32 %v89, 7
    %v91 = vsub.s32 0, %v90
    %v92 = vrot.slane %v87, %v91
    %v93 = vlaneseq
    %v94 = vshrl.u32 %v93, 7
    %v95 = vsub.s32 1, %v94
    %v96 = vrot.slane %v87, %v95
    %v131 = vunpack.c.l.b16 %v55
    %v132 = vunpack.c.h.b16 %v55
    %v133 = vunpack.c.l.b16 %v56
    %v134 = vunpack.c.h.b16 %v56
    %v135 = vunpack.c.l.b16 %v57
    %v136 = vunpack.c.h.b16 %v57
    %v137 = vunpack.c.l.b16 %v58
    %v138 = vunpack.c.h.b16 %v58
    %v139 = vunpack.c.l.b16 %v59
    %v140 = vunpack.c.h.b16 %v59
    %v141 = vunpack.c.l.b16 %v60
    %v142 = vunpack.c.h.b16 %v60
    %v143 = vunpack.c.l.b16 %v61
    %v144 = vunpack.c.h.b16 %v61
    %v145 = vunpack.c.l.b16 %v62
    %v146 = vunpack.c.h.b16 %v62
    %v147 = vunpack.c.l.b16 %v63
    %v148 = vunpack.c.h.b16 %v63
    %v149 = vunpack.c.l.b16 %v64
    %v150 = vunpack.c.h.b16 %v64
    %v151 = vunpack.c.l.b16 %v65
    %v152 = vunpack.c.h.b16 %v65
    %v153 = vunpack.c.l.b16 %v66
    %v154 = vunpack.c.h.b16 %v66
    %v155 = vunpack.c.l.b16 %v67
    %v156 = vunpack.c.h.b16 %v67
    %v157 = vunpack.c.l.b16 %v68
    %v158 = vunpack.c.h.b16 %v68
    %v159 = vunpack.c.l.b16 %v69
    %v160 = vunpack.c.h.b16 %v69
    %v161 = vunpack.c.l.b16 %v70
    %v162 = vunpack.c.h.b16 %v70
    %v163 = vunpack.c.l.b16 %v71
    %v164 = vunpack.c.h.b16 %v71
    %v165 = vunpack.c.l.b16 %v72
    %v166 = vunpack.c.h.b16 %v72
    %v167 = vunpack.c.l.b16 %v73
    %v168 = vunpack.c.h.b16 %v73
    %v169 = vunpack.c.l.b16 %v74
    %v170 = vunpack.c.h.b16 %v74
    %v171 = vunpack.c.l.b16 %v75
    %v172 = vunpack.c.h.b16 %v75
    %v173 = vunpack.c.l.b16 %v76
    %v174 = vunpack.c.h.b16 %v76
    %v175 = vunpack.c.l.b16 %v77
    %v176 = vunpack.c.h.b16 %v77
    %v177 = vunpack.c.l.b16 %v78
    %v178 = vunpack.c.h.b16 %v78
    %v179 = vunpack.c.l.b16 %v79
    %v180 = vunpack.c.h.b16 %v79
    %v181 = vunpack.c.l.b16 %v80
    %v182 = vunpack.c.h.b16 %v80
    %v183 = vunpack.c.l.b16 %v81
    %v184 = vunpack.c.h.b16 %v81
    %v185 = vunpack.c.l.b16 %v82
    %v186 = vunpack.c.h.b16 %v82
    %v187 = vunpack.c.l.b16 %v83
    %v188 = vunpack.c.h.b16 %v83
    %v189 = vunpack.c.l.b16 %v84
    %v190 = vunpack.c.h.b16 %v84
    %v191 = vunpack.c.l.b16 %v85
    %v192 = vunpack.c.h.b16 %v85
    %v193 = vunpack.c.l.b16 %v86
    %v194 = vunpack.c.h.b16 %v86
    %v195 = vpack.c.b16 %v133, %v131
    %v196 = vpack.c.b16 %v134, %v132
    %v197 = vpack.c.b16 %v137, %v135
    %v198 = vpack.c.b16 %v138, %v136
    %v199 = vpack.c.b16 %v141, %v139
    %v200 = vpack.c.b16 %v142, %v140
    %v201 = vpack.c.b16 %v145, %v143
    %v202 = vpack.c.b16 %v146, %v144
    %v203 = vpack.c.b16 %v149, %v147
    %v204 = vpack.c.b16 %v150, %v148
    %v205 = vpack.c.b16 %v153, %v151
    %v206 = vpack.c.b16 %v154, %v152
    %v207 = vpack.c.b16 %v157, %v155
    %v208 = vpack.c.b16 %v158, %v156
    %v209 = vpack.c.b16 %v161, %v159
    %v210 = vpack.c.b16 %v162, %v160
    %v211 = vpack.c.b16 %v165, %v163
    %v212 = vpack.c.b16 %v166, %v164
    %v213 = vpack.c.b16 %v169, %v167
    %v214 = vpack.c.b16 %v170, %v168
    %v215 = vpack.c.b16 %v173, %v171
    %v216 = vpack.c.b16 %v174, %v172
    %v217 = vpack.c.b16 %v177, %v175
    %v218 = vpack.c.b16 %v178, %v176
    %v219 = vpack.c.b16 %v181, %v179
    %v220 = vpack.c.b16 %v182, %v180
    %v221 = vpack.c.b16 %v185, %v183
    %v222 = vpack.c.b16 %v186, %v184
    %v223 = vpack.c.b16 %v189, %v187
    %v224 = vpack.c.b16 %v190, %v188
    %v225 = vpack.c.b16 %v193, %v191
    %v226 = vpack.c.b16 %v194, %v192
    %259 = vmatprep.subr.bf16.mxu0 %v196
    %260 = vmatpush1.bf16.msra.mxu0 %v195
    %261 = vmatprep.subr.bf16.mxu0 %v198
    %262 = vmatpush1.bf16.msra.mxu0 %v197
    %263 = vmatprep.subr.bf16.mxu0 %v200
    %264 = vmatpush1.bf16.msra.mxu0 %v199
    %265 = vmatprep.subr.bf16.mxu0 %v202
    %266 = vmatpush1.bf16.msra.mxu0 %v201
    %267 = vmatprep.subr.bf16.mxu0 %v204
    %268 = vmatpush1.bf16.msra.mxu0 %v203
    %269 = vmatprep.subr.bf16.mxu0 %v206
    %270 = vmatpush1.bf16.msra.mxu0 %v205
    %271 = vmatprep.subr.bf16.mxu0 %v208
    %272 = vmatpush1.bf16.msra.mxu0 %v207
    %273 = vmatprep.subr.bf16.mxu0 %v210
    %274 = vmatpush1.bf16.msra.mxu0 %v209
    %275 = vmatprep.subr.bf16.mxu0 %v212
    %276 = vmatpush1.bf16.msra.mxu0 %v211
    %277 = vmatprep.subr.bf16.mxu0 %v214
    %278 = vmatpush1.bf16.msra.mxu0 %v213
    %279 = vmatprep.subr.bf16.mxu0 %v216
    %280 = vmatpush1.bf16.msra.mxu0 %v215
    %281 = vmatprep.subr.bf16.mxu0 %v218
    %282 = vmatpush1.bf16.msra.mxu0 %v217
    %283 = vmatprep.subr.bf16.mxu0 %v220
    %284 = vmatpush1.bf16.msra.mxu0 %v219
    %285 = vmatprep.subr.bf16.mxu0 %v222
    %286 = vmatpush1.bf16.msra.mxu0 %v221
    %287 = vmatprep.subr.bf16.mxu0 %v224
    %288 = vmatpush1.bf16.msra.mxu0 %v223
    %289 = vmatprep.subr.bf16.mxu0 %v226
    %290 = vmatpush1.bf16.msra.mxu0 %v225
    %291 = vmatprep.mubr.bf16.mxu0 %v54
    %292 = vmatmul.mubr.bf16.gmra.mrb[0].mxu0 %v53
    %v293 = vpop.f32.mrb[0].mxu0
    %v294 = vadd.f32 %v92, %v293
    %v295 = vpop.f32.mrb[0].mxu0
    %v296 = vadd.f32 %v96, %v295
    %v297 = vpop.f32.mrb[0].mxu0
    %v298 = vpop.f32.mrb[0].mxu0
    %299 = vdwg.mxu0
    %v300 = vxor.u32 %v294, 2147483648
    %v301 = vxor.u32 %v296, 2147483648
    %v302 = vmul.f32 %v300, 1.442695
    %v303 = vpow.pop %v302
    %v304 = vmul.f32 %v301, 1.442695
    %v305 = vpow.pop %v304
    %v306 = vadd.f32 %v303, 1.0
    %v307 = vadd.f32 %v305, 1.0
    %v308 = vrcp.pop %v306
    %v309 = vmul.f32 1.0, %v308
    %v310 = vrcp.pop %v307
    %v311 = vmul.f32 1.0, %v310
    %v312 = vmul.f32 %v294, %v309
    %v313 = vmul.f32 %v296, %v311
    %v316 = vcombine.low %v312, %v313
    %v318 = vunpack.c.l.s4 1983009808
    %v319 = vunpack.c.0.s8 %v318
    %v320 = vlaneseq
    %v321 = vshrl.u32 %v320, 7
    %v322 = vsub.s32 %v319, %v321
    %v323 = vrot.slane %v316, %v322
    %325 = vst [vmem:[#allocation7] sm:$0xf] %v323
    // Predicated region
    $region22: #{fused_matmul.1} parent=1 // pred_check
      _
    $region23: #{fused_matmul.1} parent=1 // pred_check_branch
      %327 = sbr.rel (0) target = $region25
    $region24: #{fused_matmul.1} parent=1 // pred_region
      %s329 = ssub.s32 64, 64
      %330 = vsyncadd [#allocation4], %s329
      %s332 = sshll.u32 [#allocation7], 4
      %s333 = int_to_ptr.vmem [resolvable:$true] %s332
      %335 = dma.vmem_to_hbm [thread:$0]  %s333, 64, %s3, [#allocation4]
    $region25: #{fused_matmul.1} parent=1 // pred_fallthru
      _
    // Predicated region
    $region26: #{fused_matmul.1} parent=1 // pred_check
      _
    $region27: #{fused_matmul.1} parent=1 // pred_check_branch
      %337 = sbr.rel (0) target = $region29
    $region28: #{fused_matmul.1} parent=1 // pred_region
      %338 = dma.done [#allocation4], 64
    $region29: #{fused_matmul.1} parent=1 // pred_fallthru
      _
    %339 = vsyncpa [#allocation3], 1
    %340 = vsyncpa [#allocation6], 1
    %341 = vsyncpa [#allocation4], 1

</llo_original>
